<compile_context>
chip_gen: v6e
topology: v6e:2x2x1
jax: 0.10.0
libtpu: 0.0.40
codegen_flags: <defaults>
</compile_context>

<pallas_src>
import functools
import math

import jax
import jax.numpy as jnp
from jax.experimental import pallas as pl
from jax.experimental.pallas import tpu as pltpu


def _round_up(x, m):
    return (x + m - 1) // m * m


def _pair(v):
    if isinstance(v, (tuple, list)):
        return int(v[0]), int(v[1])
    return int(v), int(v)


# ----------------------------- Pallas kernel -----------------------------

def _conv_fold_kernel(x_ref, w_ref, o_ref, rhs_ref, *, taps, cin, l_out_blk):
    """One (batch, OH-chunk) per grid step; single folded MXU matmul.

    x_ref  : (P*Cin, L_blk_in)       bf16  halo'd, row-flattened phase image chunk
    w_ref  : (Cout,  KT*Cin)         bf16  folded weight (resident across steps)
    o_ref  : (Cout,  L_out_blk)      f32   lane-dense output chunk
    rhs_ref: (KT*Cin, L_out_blk)     bf16  VMEM scratch: assembled im2col RHS

    For tap t = (i, j) the needed input over all output pixels of this chunk is
    a single contiguous slab of the row-flattened phase image at a *static*
    offset (the chunk already contains its halo rows); wrap columns are garbage
    and are sliced away by the wrapper.  All slabs are packed into rhs_ref and
    contracted in one K = KH*KW*Cin matmul with f32 accumulation on the MXU.
    """
    for t, (phase, start) in enumerate(taps):
        rhs_ref[pl.ds(t * cin, cin), :] = x_ref[pl.ds(phase * cin, cin),
                                                pl.ds(start, l_out_blk)]
    o_ref[...] = jnp.dot(w_ref[...], rhs_ref[...],
                         preferred_element_type=jnp.float32).astype(o_ref.dtype)


# ------------------------------ forward ----------------------------------

@functools.partial(jax.jit, static_argnames=("kh", "kw", "sh", "sw", "ph", "pw"))
def conv2d_nchw(x, weight, *, kh, kw, sh, sw, ph, pw):
    """Conv2d (bias=False). x: NCHW f32, weight: OIHW f32 -> NCHW f32."""
    n, cin, h, w = x.shape
    cout = weight.shape[0]
    oh = (h + 2 * ph - kh) // sh + 1
    ow = (w + 2 * pw - kw) // sw + 1
    hp, wp = h + 2 * ph, w + 2 * pw

    hph = -(-hp // sh)                      # per-stride-phase height / width
    wph = -(-wp // sw)
    n_phase = sh * sw
    p_cin = n_phase * cin
    kt = kh * kw
    dh = (kh - 1) // sh                     # row halo (phase rows)
    dw = (kw - 1) // sw

    # --- glue (fused under jit, one HBM pass): bf16 cast, pad up to
    #     (sh*hph, sw*wph), stride-phase split via reshape+transpose, flatten.
    xb = jnp.pad(x.astype(jnp.bfloat16),
                 ((0, 0), (0, 0),
                  (ph, ph + sh * hph - hp),
                  (pw, pw + sw * wph - wp)))            # (N,Cin,sh*hph,sw*wph)
    xb = xb.reshape(n, cin, hph, sh, wph, sw)
    xb = jnp.transpose(xb, (0, 3, 5, 1, 2, 4))          # (N,sh,sw,Cin,hph,wph)
    flat = xb.reshape(n, p_cin, hph * wph)              # rows = phase*Cin + c

    # --- output-row tiling (second, "parallel" grid axis) --------------------
    out_dtype = jnp.float32                 # set to bf16 to halve writeback
    o_item = jnp.dtype(out_dtype).itemsize
    m_lane = 128 // math.gcd(wph, 128)      # T_oh granularity for lane-density
    rows_budget = max(1, (2 << 20) // max(1, cout * wph * o_item))  # ~2MiB/blk
    if oh <= max(rows_budget, m_lane):
        n_r, t_oh = 1, oh
        l_out_blk = _round_up(oh * wph, 128)
    else:
        t_oh = max(m_lane, rows_budget // m_lane * m_lane)
        n_r = -(-oh // t_oh)
        l_out_blk = t_oh * wph              # multiple of 128 by construction

    # Per-chunk input slab length (chunk rows + halo rows + max in-row offset).
    l_blk_in = _round_up(dh * wph + dw + l_out_blk, 128)
    need_cols = (n_r - 1) * t_oh * wph + l_blk_in
    flat = jnp.pad(flat, ((0, 0), (0, 0), (0, max(0, need_cols - hph * wph))))

    # Chunked-with-halo input in HBM (halo duplication ~dh/T_oh, i.e. tiny);
    # gives non-overlapping blocks so BlockSpec auto-pipelining applies cleanly.
    chunks = [flat[:, :, r * t_oh * wph: r * t_oh * wph + l_blk_in]
              for r in range(n_r)]
    x_chunks = jnp.stack(chunks, axis=1).reshape(n * n_r, p_cin, l_blk_in)

    # Static per-tap (phase index, flattened start offset within a chunk).
    taps = tuple(((i % sh) * sw + (j % sw), (i // sh) * wph + (j // sw))
                 for i in range(kh) for j in range(kw))

    # Folded weight: OIHW -> (Cout, KH*KW*Cin) with K ordered (i, j, c) to
    # match the RHS assembly order; bf16 for the MXU.
    w_fold = jnp.transpose(weight, (0, 2, 3, 1)).reshape(cout, kt * cin)
    w_fold = w_fold.astype(jnp.bfloat16)

    # VMEM budget from the actual (double-buffered) block sizes + headroom.
    est = (2 * _round_up(p_cin, 16) * l_blk_in * 2            # input, 2 bufs
           + _round_up(kt * cin, 16) * l_out_blk * 2          # RHS scratch
           + 2 * _round_up(cout, 16) * _round_up(kt * cin, 128) * 2  # weight
           + 2 * _round_up(cout, 8) * l_out_blk * o_item)     # output, 2 bufs
    vmem_limit = int(min(64 << 20, max(32 << 20, 2 * est + (4 << 20))))

    kernel = functools.partial(_conv_fold_kernel,
                               taps=taps, cin=cin, l_out_blk=l_out_blk)

    out_flat = pl.pallas_call(
        kernel,
        out_shape=jax.ShapeDtypeStruct((n, cout, n_r * l_out_blk), out_dtype),
        grid_spec=pltpu.PrefetchScalarGridSpec(
            num_scalar_prefetch=0,
            grid=(n, n_r),
            in_specs=[
                # One (batch, OH-chunk) input slab per step; auto double-buffered.
                pl.BlockSpec((None, p_cin, l_blk_in),
                             lambda b, r: (b * n_r + r, 0, 0)),
                # Full folded weight; constant index_map -> DMA'd once, resident.
                pl.BlockSpec((cout, kt * cin), lambda b, r: (0, 0)),
            ],
            out_specs=pl.BlockSpec((None, cout, l_out_blk),
                                   lambda b, r: (b, 0, r)),
            scratch_shapes=[pltpu.VMEM((kt * cin, l_out_blk), jnp.bfloat16)],
        ),
        compiler_params=pltpu.CompilerParams(
            dimension_semantics=("parallel", "parallel"),
            vmem_limit_bytes=vmem_limit,
        ),
    )(x_chunks, w_fold)

    # Drop lane-pad / wrap columns and garbage rows; result is already NCHW.
    out = out_flat.reshape(n, cout, n_r, l_out_blk)[:, :, :, :t_oh * wph]
    out = out.reshape(n, cout, n_r * t_oh, wph)[:, :, :oh, :ow]
    return out


# ----------------------------- InputBlock --------------------------------

class InputBlock:
    """JAX/Pallas equivalent of the PyTorch InputBlock (Conv2d, bias=False)."""

    def __init__(self, num_channels, kernel_size, stride, padding, *, key):
        self.c_in = int(num_channels[0])
        self.c_out = int(num_channels[1])
        self.kh, self.kw = _pair(kernel_size)
        self.sh, self.sw = _pair(stride)
        self.ph, self.pw = _pair(padding)

        # Deterministic kaiming-uniform-like init, same shape as nn.Conv2d.weight.
        fan_in = self.c_in * self.kh * self.kw
        bound = 1.0 / float(fan_in) ** 0.5
        self.weight = jax.random.uniform(
            key, (self.c_out, self.c_in, self.kh, self.kw),
            dtype=jnp.float32, minval=-bound, maxval=bound)     # OIHW

    def __call__(self, x):
        return conv2d_nchw(x, self.weight,
                           kh=self.kh, kw=self.kw,
                           sh=self.sh, sw=self.sw,
                           ph=self.ph, pw=self.pw)


# --------------------------------- main -----------------------------------

if __name__ == "__main__":
    key = jax.random.PRNGKey(0)
    k_w, k_x = jax.random.split(key)

    num_channels = [4, 8]
    kernel_size = (3, 3)
    stride = 1
    padding = 1

    block = InputBlock(num_channels, kernel_size, stride, padding, key=k_w)
    x = jax.random.normal(k_x, (2, 4, 16, 16), dtype=jnp.float32)   # NCHW

    y = jax.block_until_ready(block(x))

    # Reference conv (plain JAX, f32).  The Pallas path intentionally runs the
    # data in bf16 with f32 accumulation, so the tolerance is loosened.
    y_ref = jax.lax.conv_general_dilated(
        x, block.weight,
        window_strides=(stride, stride),
        padding=[(padding, padding), (padding, padding)],
        dimension_numbers=("NCHW", "OIHW", "NCHW"),
    )
    assert y.shape == y_ref.shape == (2, 8, 16, 16)
    assert jnp.allclose(y, y_ref, atol=5e-2, rtol=5e-2), \
        float(jnp.max(jnp.abs(y - y_ref)))

    print("KERNEL_OK")
</pallas_src>

<mosaic_0001>
module attributes {stable_mosaic.version = 11 : i64} {
  func.func @_conv_fold_kernel(%arg0: i32, %arg1: i32, %arg2: memref<1x4x512xbf16, #tpu.memory_space<vmem>>, %arg3: memref<8x36xbf16, #tpu.memory_space<vmem>>, %arg4: memref<1x8x384xf32, #tpu.memory_space<vmem>>, %arg5: memref<36x384xbf16, #tpu.memory_space<vmem>>) attributes {dimension_semantics = [#tpu.dimension_semantics<parallel>, #tpu.dimension_semantics<parallel>], iteration_bounds = array<i64: 2, 1>, scalar_prefetch = 0 : i64, scratch_operands = 1 : i64, tpu.core_type = #tpu.core_type<tc>, window_params = [{transform_indices = @transform_0, window_bounds = array<i64: 1, 4, 512>}, {pipeline_mode = #tpu.pipeline_mode<synchronous>, transform_indices = @transform_1, window_bounds = array<i64: 8, 36>}, {transform_indices = @transform_2, window_bounds = array<i64: 1, 8, 384>}]} {
    %c0 = arith.constant 0 : index
    %c0_0 = arith.constant 0 : index
    %c0_1 = arith.constant 0 : index
    %0 = vector.load %arg2[%c0, %c0_0, %c0_1] : memref<1x4x512xbf16, #tpu.memory_space<vmem>>, vector<1x4x384xbf16>
    %1 = vector.shape_cast %0 : vector<1x4x384xbf16> to vector<4x384xbf16>
    %c0_2 = arith.constant 0 : index
    %c0_3 = arith.constant 0 : index
    %2 = vector.load %arg5[%c0_2, %c0_3] : memref<36x384xbf16, #tpu.memory_space<vmem>>, vector<4x384xbf16>
    tpu.vector_store %arg5[%c0_2, %c0_3], %1 {strides = array<i32>} : memref<36x384xbf16, #tpu.memory_space<vmem>>, vector<4x384xbf16>,
    %c0_4 = arith.constant 0 : index
    %c0_5 = arith.constant 0 : index
    %c1 = arith.constant 1 : index
    %3 = vector.load %arg2[%c0_4, %c0_5, %c1] : memref<1x4x512xbf16, #tpu.memory_space<vmem>>, vector<1x4x384xbf16>
    %4 = vector.shape_cast %3 : vector<1x4x384xbf16> to vector<4x384xbf16>
    %c4 = arith.constant 4 : index
    %c0_6 = arith.constant 0 : index
    %5 = vector.load %arg5[%c4, %c0_6] : memref<36x384xbf16, #tpu.memory_space<vmem>>, vector<4x384xbf16>
    tpu.vector_store %arg5[%c4, %c0_6], %4 {strides = array<i32>} : memref<36x384xbf16, #tpu.memory_space<vmem>>, vector<4x384xbf16>,
    %c0_7 = arith.constant 0 : index
    %c0_8 = arith.constant 0 : index
    %c2 = arith.constant 2 : index
    %6 = vector.load %arg2[%c0_7, %c0_8, %c2] : memref<1x4x512xbf16, #tpu.memory_space<vmem>>, vector<1x4x384xbf16>
    %7 = vector.shape_cast %6 : vector<1x4x384xbf16> to vector<4x384xbf16>
    %c8 = arith.constant 8 : index
    %c0_9 = arith.constant 0 : index
    %8 = vector.load %arg5[%c8, %c0_9] : memref<36x384xbf16, #tpu.memory_space<vmem>>, vector<4x384xbf16>
    tpu.vector_store %arg5[%c8, %c0_9], %7 {strides = array<i32>} : memref<36x384xbf16, #tpu.memory_space<vmem>>, vector<4x384xbf16>,
    %c0_10 = arith.constant 0 : index
    %c0_11 = arith.constant 0 : index
    %c18 = arith.constant 18 : index
    %9 = vector.load %arg2[%c0_10, %c0_11, %c18] : memref<1x4x512xbf16, #tpu.memory_space<vmem>>, vector<1x4x384xbf16>
    %10 = vector.shape_cast %9 : vector<1x4x384xbf16> to vector<4x384xbf16>
    %c12 = arith.constant 12 : index
    %c0_12 = arith.constant 0 : index
    %11 = vector.load %arg5[%c12, %c0_12] : memref<36x384xbf16, #tpu.memory_space<vmem>>, vector<4x384xbf16>
    tpu.vector_store %arg5[%c12, %c0_12], %10 {strides = array<i32>} : memref<36x384xbf16, #tpu.memory_space<vmem>>, vector<4x384xbf16>,
    %c0_13 = arith.constant 0 : index
    %c0_14 = arith.constant 0 : index
    %c19 = arith.constant 19 : index
    %12 = vector.load %arg2[%c0_13, %c0_14, %c19] : memref<1x4x512xbf16, #tpu.memory_space<vmem>>, vector<1x4x384xbf16>
    %13 = vector.shape_cast %12 : vector<1x4x384xbf16> to vector<4x384xbf16>
    %c16 = arith.constant 16 : index
    %c0_15 = arith.constant 0 : index
    %14 = vector.load %arg5[%c16, %c0_15] : memref<36x384xbf16, #tpu.memory_space<vmem>>, vector<4x384xbf16>
    tpu.vector_store %arg5[%c16, %c0_15], %13 {strides = array<i32>} : memref<36x384xbf16, #tpu.memory_space<vmem>>, vector<4x384xbf16>,
    %c0_16 = arith.constant 0 : index
    %c0_17 = arith.constant 0 : index
    %c20 = arith.constant 20 : index
    %15 = vector.load %arg2[%c0_16, %c0_17, %c20] : memref<1x4x512xbf16, #tpu.memory_space<vmem>>, vector<1x4x384xbf16>
    %16 = vector.shape_cast %15 : vector<1x4x384xbf16> to vector<4x384xbf16>
    %c20_18 = arith.constant 20 : index
    %c0_19 = arith.constant 0 : index
    %17 = vector.load %arg5[%c20_18, %c0_19] : memref<36x384xbf16, #tpu.memory_space<vmem>>, vector<4x384xbf16>
    tpu.vector_store %arg5[%c20_18, %c0_19], %16 {strides = array<i32>} : memref<36x384xbf16, #tpu.memory_space<vmem>>, vector<4x384xbf16>,
    %c0_20 = arith.constant 0 : index
    %c0_21 = arith.constant 0 : index
    %c36 = arith.constant 36 : index
    %18 = vector.load %arg2[%c0_20, %c0_21, %c36] : memref<1x4x512xbf16, #tpu.memory_space<vmem>>, vector<1x4x384xbf16>
    %19 = vector.shape_cast %18 : vector<1x4x384xbf16> to vector<4x384xbf16>
    %c24 = arith.constant 24 : index
    %c0_22 = arith.constant 0 : index
    %20 = vector.load %arg5[%c24, %c0_22] : memref<36x384xbf16, #tpu.memory_space<vmem>>, vector<4x384xbf16>
    tpu.vector_store %arg5[%c24, %c0_22], %19 {strides = array<i32>} : memref<36x384xbf16, #tpu.memory_space<vmem>>, vector<4x384xbf16>,
    %c0_23 = arith.constant 0 : index
    %c0_24 = arith.constant 0 : index
    %c37 = arith.constant 37 : index
    %21 = vector.load %arg2[%c0_23, %c0_24, %c37] : memref<1x4x512xbf16, #tpu.memory_space<vmem>>, vector<1x4x384xbf16>
    %22 = vector.shape_cast %21 : vector<1x4x384xbf16> to vector<4x384xbf16>
    %c28 = arith.constant 28 : index
    %c0_25 = arith.constant 0 : index
    %23 = vector.load %arg5[%c28, %c0_25] : memref<36x384xbf16, #tpu.memory_space<vmem>>, vector<4x384xbf16>
    tpu.vector_store %arg5[%c28, %c0_25], %22 {strides = array<i32>} : memref<36x384xbf16, #tpu.memory_space<vmem>>, vector<4x384xbf16>,
    %c0_26 = arith.constant 0 : index
    %c0_27 = arith.constant 0 : index
    %c38 = arith.constant 38 : index
    %24 = vector.load %arg2[%c0_26, %c0_27, %c38] : memref<1x4x512xbf16, #tpu.memory_space<vmem>>, vector<1x4x384xbf16>
    %25 = vector.shape_cast %24 : vector<1x4x384xbf16> to vector<4x384xbf16>
    %c32 = arith.constant 32 : index
    %c0_28 = arith.constant 0 : index
    %26 = vector.load %arg5[%c32, %c0_28] : memref<36x384xbf16, #tpu.memory_space<vmem>>, vector<4x384xbf16>
    tpu.vector_store %arg5[%c32, %c0_28], %25 {strides = array<i32>} : memref<36x384xbf16, #tpu.memory_space<vmem>>, vector<4x384xbf16>,
    %c0_29 = arith.constant 0 : index
    %c0_30 = arith.constant 0 : index
    %27 = vector.load %arg3[%c0_29, %c0_30] : memref<8x36xbf16, #tpu.memory_space<vmem>>, vector<8x36xbf16>
    %c0_31 = arith.constant 0 : index
    %c0_32 = arith.constant 0 : index
    %28 = vector.load %arg5[%c0_31, %c0_32] : memref<36x384xbf16, #tpu.memory_space<vmem>>, vector<36x384xbf16>
    %cst = arith.constant dense<0.000000e+00> : vector<8x384xf32>
    %29 = tpu.matmul %27, %28, %cst {dimension_numbers = #tpu.dot_dimension_numbers<[1], [0], [0], [1], [0, 0, 1, 1], [], []>} : vector<8x36xbf16>, vector<36x384xbf16>, vector<8x384xf32> -> vector<8x384xf32>
    %c0_33 = arith.constant 0 : index
    %c0_34 = arith.constant 0 : index
    %c0_35 = arith.constant 0 : index
    %30 = vector.load %arg4[%c0_33, %c0_34, %c0_35] : memref<1x8x384xf32, #tpu.memory_space<vmem>>, vector<1x8x384xf32>
    %31 = vector.shape_cast %30 : vector<1x8x384xf32> to vector<8x384xf32>
    %32 = vector.shape_cast %29 : vector<8x384xf32> to vector<1x8x384xf32>
    tpu.vector_store %arg4[%c0_33, %c0_34, %c0_35], %32 {strides = array<i32>} : memref<1x8x384xf32, #tpu.memory_space<vmem>>, vector<1x8x384xf32>,
    return
  }
  func.func @transform_0(%arg0: i32, %arg1: i32) -> (i32, i32, i32) {
    %c1_i32 = arith.constant 1 : i32
    %0 = arith.muli %arg0, %c1_i32 : i32
    %1 = arith.addi %0, %arg1 : i32
    %c0_i32 = arith.constant 0 : i32
    %c0_i32_0 = arith.constant 0 : i32
    %c0_i32_1 = arith.constant 0 : i32
    return %1, %c0_i32, %c0_i32_0 : i32, i32, i32
  }
  func.func @transform_1(%arg0: i32, %arg1: i32) -> (i32, i32) {
    %c0_i32 = arith.constant 0 : i32
    %c0_i32_0 = arith.constant 0 : i32
    %c0_i32_1 = arith.constant 0 : i32
    return %c0_i32, %c0_i32_0 : i32, i32
  }
  func.func @transform_2(%arg0: i32, %arg1: i32) -> (i32, i32, i32) {
    %c0_i32 = arith.constant 0 : i32
    %c0_i32_0 = arith.constant 0 : i32
    return %arg0, %c0_i32, %arg1 : i32, i32, i32
  }
}

</mosaic_0001>

<llo_original>
// kernel: conv2d_nchw.1
$region0: #{conv2d_nchw.1}
  #allocation0 [shape = 'u32[]', space=smem, size = 0x4, offset = 0x4, fixed_abs, tag = 'smem constant byte address 0x4 - core index']
  #allocation1 [shape = 'u32[144,128]{1,0:T(1,128)}', space=vmem, size = 0x12000, scoped, tag = 'internal scratch']
  #allocation2 [shape = 'bf16[36,384]{1,0:T(8,128)(2,1)}', space=vmem, size = 0x7800, scoped, tag = 'scratch operand']
  %s0 = inlined_call_operand.vmem [shape: bf16[2,4,512], index: 0, kind: input, shape index: {}]
  %s1 = inlined_call_operand.vmem [shape: bf16[8,36], index: 1, kind: input, shape index: {}]
  %s2 = inlined_call_operand.vmem [shape: f32[2,8,384], index: 2, kind: output, shape index: {}]
  %s3 = sld [smem:[#allocation0]]
  $region41: #{conv2d_nchw.1} parent=0
    _
  %s5 = ssub.s32 1, %s3
  %s6 = scalar_select 0, %s5, %s3
  loop: start=0, step=1, limit=4
  $region2: #{conv2d_nchw.1} parent=0 // loop_pre_header
    _
  $region3: #{conv2d_nchw.1} parent=0 // loop_header
    %s8 = sphi 0, %s12
    %p9 = scmp.ge.s32.totalorder %s8, 4
    %s15 = sphi 0, %s27
    %s16 = sphi 0, %s23
    %s17 = sphi 0, %s15
    %s18 = sphi 0, %s16
    %s19 = sphi 0, %s17
    %s20 = sphi 0, %s18
    %s32 = sphi 0, %s34
    %s35 = sphi 0, %s32
    %s36 = sphi 0, %s35
    %s52 = sphi 0, %s36
    %s56 = sphi 0, %s56
    %s58 = sphi 0, %s56
    %s59 = sphi 0, %s58
    %s73 = sphi 0, %s59
    %s81 = sphi 0, %s83
    %s84 = sphi 0, %s81
    %s85 = sphi 0, %s84
    %s101 = sphi 0, %s85
  $region4: #{conv2d_nchw.1} parent=0 // loop_header_branch
    %11 = sbr.rel (%p9) target = $region8
  $region5: #{conv2d_nchw.1} parent=0 // loop_body
    %s13 = ssub.s32 %s8, 1
    %s14 = ssub.s32 %s8, 2
    %s21 = sadd.s32 1, %s16
    %p22 = scmp.ge.s32.totalorder %s21, 1
    %s23 = scalar_select %p22, 0, %s21
    %s24 = sadd.s32 1, %s15
    %s25 = scalar_select %p22, %s24, %s15
    %p26 = scmp.ge.s32.totalorder %s25, 2
    %s27 = scalar_select %p26, 0, %s25
    %s28 = sadd.s32 %s15, %s16
    %s29 = sadd.s32 %s27, %s23
    %s30 = ssub.s32 %s28, %s29
    %p31 = scmp.eq.s32.totalorder %s30, 0
    %s33 = sadd.s32 %s32, 1
    %s34 = scalar_select %p31, %s32, %s33
    %p37 = pneg %p31
    %p38 = scmp.eq.s32.totalorder %s8, 1
    %p39 = por %p37, %p38
    %p40 = scmp.ne.s32.totalorder %s32, %s35
    %p41 = scmp.eq.s32.totalorder %s8, 0
    %p42 = por %p40, %p41
    %p43 = scmp.ne.s32.totalorder %s32, %s35
    %p44 = scmp.eq.s32.totalorder %s13, 1
    %p45 = por %p43, %p44
    %p46 = scmp.ne.s32.totalorder %s35, %s36
    %p47 = scmp.eq.s32.totalorder %s13, 0
    %p48 = por %p46, %p47
    %p49 = scmp.ne.s32.totalorder %s35, %s36
    %p50 = scmp.eq.s32.totalorder %s14, 1
    %p51 = por %p49, %p50
    %p53 = scmp.ne.s32.totalorder %s36, %s52
    %p54 = scmp.eq.s32.totalorder %s14, 0
    %p55 = por %p53, %p54
    %s57 = sadd.s32 %s56, 1
    %p60 = scmp.eq.s32.totalorder %s8, 1
    %p61 = scmp.ne.s32.totalorder %s56, %s58
    %p62 = scmp.eq.s32.totalorder %s8, 0
    %p63 = por %p61, %p62
    %p64 = scmp.ne.s32.totalorder %s56, %s58
    %p65 = scmp.eq.s32.totalorder %s13, 1
    %p66 = por %p64, %p65
    %p67 = scmp.ne.s32.totalorder %s58, %s59
    %p68 = scmp.eq.s32.totalorder %s13, 0
    %p69 = por %p67, %p68
    %p70 = scmp.ne.s32.totalorder %s58, %s59
    %p71 = scmp.eq.s32.totalorder %s14, 1
    %p72 = por %p70, %p71
    %p74 = scmp.ne.s32.totalorder %s59, %s73
    %p75 = scmp.eq.s32.totalorder %s14, 0
    %p76 = por %p74, %p75
    %s77 = ssub.s32 %s15, %s27
    %s78 = ssub.s32 %s16, %s23
    %s79 = sor.u32 %s77, %s78
    %p80 = scmp.eq.s32.totalorder %s79, 0
    %s82 = sadd.s32 %s81, 1
    %s83 = scalar_select %p80, %s81, %s82
    %p86 = pneg %p80
    %p87 = scmp.eq.s32.totalorder %s8, 1
    %p88 = por %p86, %p87
    %p89 = scmp.ne.s32.totalorder %s81, %s84
    %p90 = scmp.eq.s32.totalorder %s8, 0
    %p91 = por %p89, %p90
    %p92 = scmp.ne.s32.totalorder %s81, %s84
    %p93 = scmp.eq.s32.totalorder %s13, 1
    %p94 = por %p92, %p93
    %p95 = scmp.ne.s32.totalorder %s84, %s85
    %p96 = scmp.eq.s32.totalorder %s13, 0
    %p97 = por %p95, %p96
    %p98 = scmp.ne.s32.totalorder %s84, %s85
    %p99 = scmp.eq.s32.totalorder %s14, 1
    %p100 = por %p98, %p99
    %p102 = scmp.ne.s32.totalorder %s85, %s101
    %p103 = scmp.eq.s32.totalorder %s14, 0
    %p104 = por %p102, %p103
    %p105 = scmp.le.s32.totalorder 1, %s8
    %p106 = scmp.lt.s32.totalorder %s8, 3
    %p107 = pnand %p105, %p106
    %p108 = pneg %p107
    // Predicated region
    $region9: #{conv2d_nchw.1} parent=5 // pred_check
      _
    $region10: #{conv2d_nchw.1} parent=5 // pred_check_branch
      %110 = sbr.rel (%p107) target = $region12
    $region11: #{conv2d_nchw.1} parent=5 // pred_region
      %s111 = ssub.s32 %s8, 1
      // Predicated region
      $region13: #{conv2d_nchw.1} parent=11 // pred_check
        %p112 = pneg %p69
      $region14: #{conv2d_nchw.1} parent=11 // pred_check_branch
        %114 = sbr.rel (%p112) target = $region16
      $region15: #{conv2d_nchw.1} parent=11 // pred_region
        _
      $region16: #{conv2d_nchw.1} parent=11 // pred_fallthru
        _
    $region12: #{conv2d_nchw.1} parent=5 // pred_fallthru
      _
    %p115 = scmp.lt.s32.totalorder %s8, 2
    // Predicated region
    $region17: #{conv2d_nchw.1} parent=5 // pred_check
      %p116 = pneg %p115
    $region18: #{conv2d_nchw.1} parent=5 // pred_check_branch
      %118 = sbr.rel (%p116) target = $region20
    $region19: #{conv2d_nchw.1} parent=5 // pred_region
      // Predicated region
      $region21: #{conv2d_nchw.1} parent=19 // pred_check
        %p119 = pneg %p42
      $region22: #{conv2d_nchw.1} parent=19 // pred_check_branch
        %121 = sbr.rel (%p119) target = $region24
      $region23: #{conv2d_nchw.1} parent=19 // pred_region
        %s122 = sadd.s32 %s15, %s16
        %p123 = scmp.lt.s32.totalorder %s122, 1
        %s124 = scalar_select %p123, %s122, 1
        %s125 = smul.addr %s124, 4
        %s126 = smul.addr %s125, 2
        %s127 = scalar_lea.vmem %s0, %s126
        %s128 = sadd.s32 %s15, %s16
      $region24: #{conv2d_nchw.1} parent=19 // pred_fallthru
        _
    $region20: #{conv2d_nchw.1} parent=5 // pred_fallthru
      _
    %p129 = scmp.le.s32.totalorder 1, %s8
    %p130 = scmp.lt.s32.totalorder %s8, 3
    %p131 = pnand %p129, %p130
    %p132 = pneg %p131
    // Predicated region
    $region25: #{conv2d_nchw.1} parent=5 // pred_check
      _
    $region26: #{conv2d_nchw.1} parent=5 // pred_check_branch
      %134 = sbr.rel (%p131) target = $region28
    $region27: #{conv2d_nchw.1} parent=5 // pred_region
      %s135 = ssub.s32 %s8, 1
      %s136 = sadd.s32 %s17, %s18
      %p137 = scmp.lt.s32.totalorder %s136, 1
      %s138 = scalar_select %p137, %s136, 1
      %s139 = smul.addr %s138, 4
      %s140 = smul.addr %s139, 2
      %s141 = scalar_lea.vmem %s0, %s140
      %p142 = pneg %p48
      %p143 = pneg %p45
      %p144 = pneg %p69
      %p145 = pneg %p66
      %p146 = pneg %p97
      %p147 = pneg %p94
      %s148 = smul.u32 3, %s18
      %p149 = scmp.lt.s32.totalorder %s17, 1
      %s150 = scalar_select %p149, %s17, 1
      %p151 = scmp.lt.s32.totalorder %s148, 2
      %s152 = scalar_select %p151, %s148, 2
      %s153 = smul.addr %s150, 3
      %s154 = sadd.s32 %s152, %s153
      %s155 = smul.addr %s154, 8
      %s156 = scalar_lea.vmem %s2, %s155
      %s157 = sadd.s32 %s17, %s18
      %p158 = scmp.lt.s32.totalorder %s157, 1
      %s159 = scalar_select %p158, %s157, 1
      %s160 = smul.addr %s159, 4
      %s161 = smul.addr %s160, 2
      %s162 = scalar_lea.vmem %s0, %s161
      %s163 = sadd.s32 %s17, %s18
      %s164 = smul.u32 3, %s18
      %p165 = scmp.lt.s32.totalorder %s17, 1
      %s166 = scalar_select %p165, %s17, 1
      %p167 = scmp.lt.s32.totalorder %s164, 2
      %s168 = scalar_select %p167, %s164, 2
      %s169 = smul.addr %s166, 3
      %s170 = sadd.s32 %s168, %s169
      %s171 = smul.addr %s170, 8
      %s172 = scalar_lea.vmem %s2, %s171
      %s173 = smul.u32 3, %s18
      %v175 = vld [vmem:[%s162] sm:$0x3f]
      %v177 = vcombine.high %v175, %v175
      %v179 = vunpack.c.l.s4 1983009808
      %v180 = vunpack.c.0.s8 %v179
      %v181 = vlaneseq
      %v182 = vshrl.u32 %v181, 7
      %v183 = vsub.s32 %v180, %v182
      %v184 = vrot.slane %v175, %v183
      %v186 = vunpack.c.l.s4 1983009808
      %v187 = vunpack.c.0.s8 %v186
      %v188 = vlaneseq
      %v189 = vshrl.u32 %v188, 7
      %v190 = vsub.s32 %v187, %v189
      %v191 = vrot.slane %v177, %v190
      %194 = vst [vmem:[#allocation2] sm:$0x33] %v184
      %195 = vst [vmem:[#allocation2 + $0x8] sm:$0x3] %v191
      %v196 = vld [vmem:[%s162] sm:$0xff]
      %v198 = vcombine.low %v196, %v196
      %v200 = vunpack.c.l.s4 1983009808
      %v201 = vunpack.c.0.s8 %v200
      %v202 = vlaneseq
      %v203 = vshrl.u32 %v202, 7
      %v204 = vsub.s32 %v201, %v203
      %v205 = vrot.slane %v198, %v204
      %v207 = vunpack.c.l.s4 1983009808
      %v208 = vunpack.c.0.s8 %v207
      %v209 = vlaneseq
      %v210 = vshrl.u32 %v209, 7
      %v211 = vsub.s32 %v208, %v210
      %v212 = vrot.slane %v196, %v211
      %213 = vrot.lane.b32.xlu0 %v205, 127
      %v214 = vpop.permute.xlu0 %213
      %215 = vrot.lane.b32.xlu0 %v212, 127
      %v216 = vpop.permute.xlu0 %215
      %v217 = vrot.slane %v214, 4
      %v218 = vrot.slane %v216, 4
      %vm219 = vcmask 1043456
      %v220 = vsel %vm219, %v217, %v218
      %vm221 = vcmask 1039360
      %v222 = vsel %vm221, %v214, %v220
      %v223 = vsel %vm221, %v216, %v218
      %226 = vst [vmem:[#allocation2] sm:$0xcc] %v222
      %227 = vst [vmem:[#allocation2 + $0x8] sm:$0xc] %v223
      %v228 = vld [vmem:[%s162] sm:$0xff]
      %v230 = vcombine.high %v228, %v228
      %v232 = vunpack.c.l.s4 1983009808
      %v233 = vunpack.c.0.s8 %v232
      %v234 = vlaneseq
      %v235 = vshrl.u32 %v234, 7
      %v236 = vsub.s32 %v233, %v235
      %v237 = vrot.slane %v228, %v236
      %v239 = vunpack.c.l.s4 1983009808
      %v240 = vunpack.c.0.s8 %v239
      %v241 = vlaneseq
      %v242 = vshrl.u32 %v241, 7
      %v243 = vsub.s32 %v240, %v242
      %v244 = vrot.slane %v230, %v243
      %245 = vrot.lane.b32.xlu0 %v237, 126
      %v246 = vpop.permute.xlu0 %245
      %247 = vrot.lane.b32.xlu0 %v244, 126
      %v248 = vpop.permute.xlu0 %247
      %v249 = vrot.slane %v246, 4
      %v250 = vrot.slane %v248, 4
      %v251 = vsel %vm219, %v249, %v250
      %vm252 = vcmask 1031168
      %v253 = vsel %vm252, %v246, %v251
      %v254 = vsel %vm252, %v248, %v250
      %257 = vst [vmem:[#allocation2 + $0xc] sm:$0x33] %v253
      %258 = vst [vmem:[#allocation2 + $0x14] sm:$0x3] %v254
      %v259 = vld [vmem:[%s162] sm:$0xff]
      %v261 = vcombine.low %v259, %v259
      %v263 = vunpack.c.l.s4 1983009808
      %v264 = vunpack.c.0.s8 %v263
      %v265 = vlaneseq
      %v266 = vshrl.u32 %v265, 7
      %v267 = vsub.s32 %v264, %v266
      %v268 = vrot.slane %v261, %v267
      %v270 = vunpack.c.l.s4 1983009808
      %v271 = vunpack.c.0.s8 %v270
      %v272 = vlaneseq
      %v273 = vshrl.u32 %v272, 7
      %v274 = vsub.s32 %v271, %v273
      %v275 = vrot.slane %v259, %v274
      %276 = vrot.lane.b32.xlu0 %v268, 110
      %v277 = vpop.permute.xlu0 %276
      %278 = vrot.lane.b32.xlu0 %v275, 110
      %v279 = vpop.permute.xlu0 %278
      %v280 = vrot.slane %v277, 4
      %v281 = vrot.slane %v279, 4
      %v282 = vsel %vm219, %v280, %v281
      %vm283 = vcmask 900096
      %v284 = vsel %vm283, %v277, %v282
      %v285 = vsel %vm283, %v279, %v281
      %288 = vst [vmem:[#allocation2 + $0xc] sm:$0xcc] %v284
      %289 = vst [vmem:[#allocation2 + $0x14] sm:$0xc] %v285
      %v290 = vld [vmem:[%s162] sm:$0xff]
      %v292 = vcombine.high %v290, %v290
      %v294 = vunpack.c.l.s4 1983009808
      %v295 = vunpack.c.0.s8 %v294
      %v296 = vlaneseq
      %v297 = vshrl.u32 %v296, 7
      %v298 = vsub.s32 %v295, %v297
      %v299 = vrot.slane %v290, %v298
      %v301 = vunpack.c.l.s4 1983009808
      %v302 = vunpack.c.0.s8 %v301
      %v303 = vlaneseq
      %v304 = vshrl.u32 %v303, 7
      %v305 = vsub.s32 %v302, %v304
      %v306 = vrot.slane %v292, %v305
      %307 = vrot.lane.b32.xlu0 %v299, 109
      %v308 = vpop.permute.xlu0 %307
      %309 = vrot.lane.b32.xlu0 %v306, 109
      %v310 = vpop.permute.xlu0 %309
      %v311 = vrot.slane %v308, 4
      %v312 = vrot.slane %v310, 4
      %v313 = vsel %vm219, %v311, %v312
      %vm314 = vcmask 891904
      %v315 = vsel %vm314, %v308, %v313
      %v316 = vsel %vm314, %v310, %v312
      %319 = vst [vmem:[#allocation2 + $0x18] sm:$0x33] %v315
      %320 = vst [vmem:[#allocation2 + $0x20] sm:$0x3] %v316
      %v321 = vld [vmem:[%s162] sm:$0xff]
      %v323 = vcombine.low %v321, %v321
      %v325 = vunpack.c.l.s4 1983009808
      %v326 = vunpack.c.0.s8 %v325
      %v327 = vlaneseq
      %v328 = vshrl.u32 %v327, 7
      %v329 = vsub.s32 %v326, %v328
      %v330 = vrot.slane %v323, %v329
      %v332 = vunpack.c.l.s4 1983009808
      %v333 = vunpack.c.0.s8 %v332
      %v334 = vlaneseq
      %v335 = vshrl.u32 %v334, 7
      %v336 = vsub.s32 %v333, %v335
      %v337 = vrot.slane %v321, %v336
      %338 = vrot.lane.b32.xlu0 %v330, 108
      %v339 = vpop.permute.xlu0 %338
      %340 = vrot.lane.b32.xlu0 %v337, 108
      %v341 = vpop.permute.xlu0 %340
      %v342 = vrot.slane %v339, 4
      %v343 = vrot.slane %v341, 4
      %v344 = vsel %vm219, %v342, %v343
      %vm345 = vcmask 883712
      %v346 = vsel %vm345, %v339, %v344
      %v347 = vsel %vm345, %v341, %v343
      %350 = vst [vmem:[#allocation2 + $0x18] sm:$0xcc] %v346
      %351 = vst [vmem:[#allocation2 + $0x20] sm:$0xc] %v347
      %v352 = vld [vmem:[%s162] sm:$0xff]
      %v354 = vcombine.high %v352, %v352
      %v356 = vunpack.c.l.s4 1983009808
      %v357 = vunpack.c.0.s8 %v356
      %v358 = vlaneseq
      %v359 = vshrl.u32 %v358, 7
      %v360 = vsub.s32 %v357, %v359
      %v361 = vrot.slane %v352, %v360
      %v363 = vunpack.c.l.s4 1983009808
      %v364 = vunpack.c.0.s8 %v363
      %v365 = vlaneseq
      %v366 = vshrl.u32 %v365, 7
      %v367 = vsub.s32 %v364, %v366
      %v368 = vrot.slane %v354, %v367
      %369 = vrot.lane.b32.xlu0 %v361, 92
      %v370 = vpop.permute.xlu0 %369
      %371 = vrot.lane.b32.xlu0 %v368, 92
      %v372 = vpop.permute.xlu0 %371
      %v373 = vrot.slane %v370, 4
      %v374 = vrot.slane %v372, 4
      %v375 = vsel %vm219, %v373, %v374
      %vm376 = vcmask 752640
      %v377 = vsel %vm376, %v370, %v375
      %v378 = vsel %vm376, %v372, %v374
      %381 = vst [vmem:[#allocation2 + $0x24] sm:$0x33] %v377
      %382 = vst [vmem:[#allocation2 + $0x2c] sm:$0x3] %v378
      %v383 = vld [vmem:[%s162] sm:$0xff]
      %v385 = vcombine.low %v383, %v383
      %v387 = vunpack.c.l.s4 1983009808
      %v388 = vunpack.c.0.s8 %v387
      %v389 = vlaneseq
      %v390 = vshrl.u32 %v389, 7
      %v391 = vsub.s32 %v388, %v390
      %v392 = vrot.slane %v385, %v391
      %v394 = vunpack.c.l.s4 1983009808
      %v395 = vunpack.c.0.s8 %v394
      %v396 = vlaneseq
      %v397 = vshrl.u32 %v396, 7
      %v398 = vsub.s32 %v395, %v397
      %v399 = vrot.slane %v383, %v398
      %400 = vrot.lane.b32.xlu0 %v392, 91
      %v401 = vpop.permute.xlu0 %400
      %402 = vrot.lane.b32.xlu0 %v399, 91
      %v403 = vpop.permute.xlu0 %402
      %v404 = vrot.slane %v401, 4
      %v405 = vrot.slane %v403, 4
      %v406 = vsel %vm219, %v404, %v405
      %vm407 = vcmask 744448
      %v408 = vsel %vm407, %v401, %v406
      %v409 = vsel %vm407, %v403, %v405
      %412 = vst [vmem:[#allocation2 + $0x24] sm:$0xcc] %v408
      %413 = vst [vmem:[#allocation2 + $0x2c] sm:$0xc] %v409
      %v414 = vld [vmem:[%s162] sm:$0xff]
      %v416 = vcombine.high %v414, %v414
      %v418 = vunpack.c.l.s4 1983009808
      %v419 = vunpack.c.0.s8 %v418
      %v420 = vlaneseq
      %v421 = vshrl.u32 %v420, 7
      %v422 = vsub.s32 %v419, %v421
      %v423 = vrot.slane %v414, %v422
      %v425 = vunpack.c.l.s4 1983009808
      %v426 = vunpack.c.0.s8 %v425
      %v427 = vlaneseq
      %v428 = vshrl.u32 %v427, 7
      %v429 = vsub.s32 %v426, %v428
      %v430 = vrot.slane %v416, %v429
      %431 = vrot.lane.b32.xlu0 %v423, 90
      %v432 = vpop.permute.xlu0 %431
      %433 = vrot.lane.b32.xlu0 %v430, 90
      %v434 = vpop.permute.xlu0 %433
      %v435 = vrot.slane %v432, 4
      %v436 = vrot.slane %v434, 4
      %v437 = vsel %vm219, %v435, %v436
      %vm438 = vcmask 736256
      %v439 = vsel %vm438, %v432, %v437
      %v440 = vsel %vm438, %v434, %v436
      %443 = vst [vmem:[#allocation2 + $0x30] sm:$0x33] %v439
      %444 = vst [vmem:[#allocation2 + $0x38] sm:$0x3] %v440
      %v445 = vld [vmem:[%s1] sm:$0xf]
      %v446 = vld [vmem:[#allocation2] sm:$0xff]
      %v447 = vld [vmem:[#allocation2 + $0x8] sm:$0xf]
      %v448 = vld [vmem:[#allocation2 + $0xc] sm:$0xff]
      %v449 = vld [vmem:[#allocation2 + $0x14] sm:$0xf]
      %v450 = vld [vmem:[#allocation2 + $0x18] sm:$0xff]
      %v451 = vld [vmem:[#allocation2 + $0x20] sm:$0xf]
      %v452 = vld [vmem:[#allocation2 + $0x24] sm:$0xff]
      %v453 = vld [vmem:[#allocation2 + $0x2c] sm:$0xf]
      %v454 = vld [vmem:[#allocation2 + $0x30] sm:$0x33]
      %v455 = vld [vmem:[#allocation2 + $0x38] sm:$0x3]
      %v466 = vunpack.c.l.b16 %v446
      %v467 = vunpack.c.h.b16 %v446
      %v468 = vunpack.c.l.b16 %v447
      %v469 = vunpack.c.l.b16 %v448
      %v470 = vunpack.c.h.b16 %v448
      %v471 = vunpack.c.l.b16 %v449
      %v472 = vunpack.c.l.b16 %v450
      %v473 = vunpack.c.h.b16 %v450
      %v474 = vunpack.c.l.b16 %v451
      %v475 = vunpack.c.l.b16 %v452
      %v476 = vunpack.c.h.b16 %v452
      %v477 = vunpack.c.l.b16 %v453
      %v478 = vunpack.c.l.b16 %v454
      %v479 = vunpack.c.h.b16 %v454
      %v480 = vunpack.c.l.b16 %v455
      %v481 = vpack.c.b16 %v469, %v466
      %v482 = vpack.c.b16 %v470, %v467
      %v483 = vpack.c.b16 %v471, %v468
      %v484 = vpack.c.b16 %v475, %v472
      %v485 = vpack.c.b16 %v476, %v473
      %v486 = vpack.c.b16 %v477, %v474
      %v487 = vpack.c.b16 %v478, %v478
      %v488 = vpack.c.b16 %v479, %v479
      %v489 = vpack.c.b16 %v480, %v480
      %vm496 = vcmask 293888
      %v498 = vsel %vm496, %v445, 0
      %vm500 = vcmask 1041408
      %v502 = vsel %vm500, %v487, 0
      %v505 = vsel %vm500, %v488, 0
      %v508 = vsel %vm500, %v489, 0
      %510 = vmatprep.subr.bf16.mxu0 0
      %511 = vmatpush1.bf16.msra.mxu0 0
      %512 = vmatprep.subr.bf16.mxu0 0
      %513 = vmatpush1.bf16.msra.mxu0 0
      %514 = vmatprep.subr.bf16.mxu0 0
      %515 = vmatpush1.bf16.msra.mxu0 0
      %516 = vmatprep.subr.bf16.mxu0 0
      %517 = vmatpush1.bf16.msra.mxu0 0
      %518 = vmatprep.subr.bf16.mxu0 0
      %519 = vmatpush1.bf16.msra.mxu0 0
      %520 = vmatprep.subr.bf16.mxu0 %v505
      %521 = vmatpush1.bf16.msra.mxu0 %v502
      %522 = vmatprep.subr.bf16.mxu0 %v485
      %523 = vmatpush1.bf16.msra.mxu0 %v484
      %524 = vmatprep.subr.bf16.mxu0 %v482
      %525 = vmatpush1.bf16.msra.mxu0 %v481
      %526 = vmatprep.subr.bf16.mxu0 0
      %527 = vmatpush2.bf16.msra.mxu0 0
      %528 = vmatprep.subr.bf16.mxu0 0
      %529 = vmatpush2.bf16.msra.mxu0 0
      %530 = vmatprep.subr.bf16.mxu0 0
      %531 = vmatpush2.bf16.msra.mxu0 0
      %532 = vmatprep.subr.bf16.mxu0 0
      %533 = vmatpush2.bf16.msra.mxu0 0
      %534 = vmatprep.subr.bf16.mxu0 0
      %535 = vmatpush2.bf16.msra.mxu0 0
      %536 = vmatprep.subr.bf16.mxu0 0
      %537 = vmatpush2.bf16.msra.mxu0 0
      %538 = vmatprep.subr.bf16.mxu0 0
      %539 = vmatpush2.bf16.msra.mxu0 0
      %540 = vmatprep.subr.bf16.mxu0 0
      %541 = vmatpush2.bf16.msra.mxu0 0
      %542 = vmatprep.mubr.bf16.mxu0 0
      %543 = vmatmul.mubr.bf16.gmra.mxu0 %v498
      %v544 = vpop.f32.mrf.mxu0
      %v545 = vadd.f32 0.0, %v544
      %v546 = vpop.f32.mrf.mxu0
      %v547 = vadd.f32 0.0, %v546
      %v548 = vpop.f32.mrf.mxu0
      %v549 = vpop.f32.mrf.mxu0
      %550 = vdwg.mxu0
      %551 = vmatprep.subr.bf16.mxu0 0
      %552 = vmatpush1.bf16.msra.mxu0 0
      %553 = vmatprep.subr.bf16.mxu0 0
      %554 = vmatpush1.bf16.msra.mxu0 0
      %555 = vmatprep.subr.bf16.mxu0 0
      %556 = vmatpush1.bf16.msra.mxu0 0
      %557 = vmatprep.subr.bf16.mxu0 0
      %558 = vmatpush1.bf16.msra.mxu0 0
      %559 = vmatprep.subr.bf16.mxu0 0
      %560 = vmatpush1.bf16.msra.mxu0 0
      %561 = vmatprep.subr.bf16.mxu0 0
      %562 = vmatpush1.bf16.msra.mxu0 %v508
      %563 = vmatprep.subr.bf16.mxu0 0
      %564 = vmatpush1.bf16.msra.mxu0 %v486
      %565 = vmatprep.subr.bf16.mxu0 0
      %566 = vmatpush1.bf16.msra.mxu0 %v483
      %567 = vmatprep.subr.bf16.mxu0 0
      %568 = vmatpush2.bf16.msra.mxu0 0
      %569 = vmatprep.subr.bf16.mxu0 0
      %570 = vmatpush2.bf16.msra.mxu0 0
      %571 = vmatprep.subr.bf16.mxu0 0
      %572 = vmatpush2.bf16.msra.mxu0 0
      %573 = vmatprep.subr.bf16.mxu0 0
      %574 = vmatpush2.bf16.msra.mxu0 0
      %575 = vmatprep.subr.bf16.mxu0 0
      %576 = vmatpush2.bf16.msra.mxu0 0
      %577 = vmatprep.subr.bf16.mxu0 0
      %578 = vmatpush2.bf16.msra.mxu0 0
      %579 = vmatprep.subr.bf16.mxu0 0
      %580 = vmatpush2.bf16.msra.mxu0 0
      %581 = vmatprep.subr.bf16.mxu0 0
      %582 = vmatpush2.bf16.msra.mxu0 0
      %583 = vmatprep.mubr.bf16.mxu0 0
      %584 = vmatmul.mubr.bf16.gmra.mxu0 %v498
      %v585 = vpop.f32.mrf.mxu0
      %v586 = vadd.f32 0.0, %v585
      %v587 = vpop.f32.mrf.mxu0
      %v588 = vpop.f32.mrf.mxu0
      %v589 = vpop.f32.mrf.mxu0
      %590 = vdwg.mxu0
      %591 = vst [vmem:[%s172] sm:$0xff] %v545
      %592 = vst [vmem:[%s172 + $0x8] sm:$0xff] %v547
      %593 = vst [vmem:[%s172 + $0x10] sm:$0xff] %v586
      %s594 = smul.u32 3, %s18
      %p595 = scmp.lt.s32.totalorder %s17, 1
      %s596 = scalar_select %p595, %s17, 1
      %p597 = scmp.lt.s32.totalorder %s594, 2
      %s598 = scalar_select %p597, %s594, 2
      %s599 = smul.addr %s596, 3
      %s600 = sadd.s32 %s598, %s599
      %s601 = smul.addr %s600, 8
      %s602 = scalar_lea.vmem %s2, %s601
      // Predicated region
      $region29: #{conv2d_nchw.1} parent=27 // pred_check
        %p603 = pneg %p94
      $region30: #{conv2d_nchw.1} parent=27 // pred_check_branch
        %605 = sbr.rel (%p603) target = $region32
      $region31: #{conv2d_nchw.1} parent=27 // pred_region
        %s606 = smul.u32 3, %s18
      $region32: #{conv2d_nchw.1} parent=27 // pred_fallthru
        _
    $region28: #{conv2d_nchw.1} parent=5 // pred_fallthru
      _
    %p607 = scmp.le.s32.totalorder 2, %s8
    // Predicated region
    $region33: #{conv2d_nchw.1} parent=5 // pred_check
      %p608 = pneg %p607
    $region34: #{conv2d_nchw.1} parent=5 // pred_check_branch
      %610 = sbr.rel (%p608) target = $region36
    $region35: #{conv2d_nchw.1} parent=5 // pred_region
      %s611 = ssub.s32 %s8, 2
      // Predicated region
      $region37: #{conv2d_nchw.1} parent=35 // pred_check
        %p612 = pneg %p100
      $region38: #{conv2d_nchw.1} parent=35 // pred_check_branch
        %614 = sbr.rel (%p612) target = $region40
      $region39: #{conv2d_nchw.1} parent=35 // pred_region
        %s615 = smul.u32 3, %s20
        %p616 = scmp.lt.s32.totalorder %s19, 1
        %s617 = scalar_select %p616, %s19, 1
        %p618 = scmp.lt.s32.totalorder %s615, 2
        %s619 = scalar_select %p618, %s615, 2
        %s620 = smul.addr %s617, 3
        %s621 = sadd.s32 %s619, %s620
        %s622 = smul.addr %s621, 8
        %s623 = scalar_lea.vmem %s2, %s622
      $region40: #{conv2d_nchw.1} parent=35 // pred_fallthru
        _
    $region36: #{conv2d_nchw.1} parent=5 // pred_fallthru
      _
  $region6: #{conv2d_nchw.1} parent=0 // loop_footer
    %s12 = sadd.s32 1, %s8
  $region7: #{conv2d_nchw.1} parent=0 // loop_footer_branch
    %7 = sbr.rel target = $region3
  $region8: #{conv2d_nchw.1} parent=0 // loop_exit
    _

</llo_original>
